<compile_context>
chip_gen: v7x
topology: tpu7x:2x2x1
jax: 0.10.0
libtpu: 0.0.40
codegen_flags: <defaults>
</compile_context>

<pallas_src>
import functools
import math

import jax
import jax.numpy as jnp
import numpy as np
from jax.experimental import pallas as pl
from jax.experimental.pallas import tpu as pltpu


_VMEM_LIMIT = 48 * 1024 * 1024   # safe on v5e/v6e (128 MiB) and v7x (64 MiB)


# ------------------------------ tile pickers ----------------------------------

def _largest_divisor(dim, target, quantum):
    """Largest multiple of `quantum` that divides `dim` and is <= target (or None)."""
    t = (min(target, dim) // quantum) * quantum
    while t >= quantum:
        if dim % t == 0:
            return t
        t -= quantum
    return None


def _pick_m_tile(m, target=1024):
    if m <= target:
        return m
    return _largest_divisor(m, target, 16)          # None -> caller pads (rare)


def _pick_ch_tile(c, target):
    if c <= target:
        return c
    for q in (256, 128):                            # MXU-friendly multiples first
        t = _largest_divisor(c, target, q)
        if t is not None:
            return t
    return c


# ------------------------------ Pallas kernels --------------------------------

def _mm_kernel(x_ref, w_ref, b_ref, o_ref, *, relu):
    """1x1 conv: out = act(x @ w + b).  Full K inside the block (no reduction axis)."""
    out = jnp.dot(x_ref[...], w_ref[...], preferred_element_type=jnp.float32)
    out = out + b_ref[...]
    if relu:
        out = jnp.maximum(out, 0.0)
    o_ref[...] = out.astype(o_ref.dtype)


def _mm_res_kernel(x_ref, w_ref, b_ref, r_ref, o_ref, *, relu):
    """Tail w/ identity shortcut: out = act(x @ w + b + residual).  `relu` is
    applied AFTER the residual add (module semantics)."""
    out = jnp.dot(x_ref[...], w_ref[...], preferred_element_type=jnp.float32)
    out = out + b_ref[...] + r_ref[...].astype(jnp.float32)
    if relu:
        out = jnp.maximum(out, 0.0)
    o_ref[...] = out.astype(o_ref.dtype)


def _mm_dual_kernel(x_ref, w_ref, b_ref, xs_ref, ws_ref, o_ref, *, relu):
    """Tail w/ projection shortcut fused in: out = act(x @ w + xs @ ws + b)."""
    out = (jnp.dot(x_ref[...], w_ref[...], preferred_element_type=jnp.float32)
           + jnp.dot(xs_ref[...], ws_ref[...], preferred_element_type=jnp.float32)
           + b_ref[...])
    if relu:
        out = jnp.maximum(out, 0.0)
    o_ref[...] = out.astype(o_ref.dtype)


def _conv3x3_kernel(x_ref, w_ref, b_ref, o_ref, *, stride, relu):
    """3x3 conv + bias (+ ReLU), 9-tap reduction fully inside the kernel.

    x_ref : (s*s, Hh, Wh, Cin)  whole (phase-split) padded image, bf16,
                                 resident across row/cout grid steps
    w_ref : (9, Cin, tn)         bf16 (BN scale folded)
    b_ref : (1, tn)              f32
    o_ref : (1, th, Wo, tn)
    """
    s = stride
    _, th, wo, tn = o_ref.shape
    cin = x_ref.shape[-1]
    oy0 = pl.program_id(1) * th                       # first output row of this block
    acc = jnp.zeros((th * wo, tn), jnp.float32)
    for ky in range(3):
        for kx in range(3):
            p = (ky % s) * s + (kx % s)               # phase (static)
            tap = x_ref[p, pl.ds(oy0 + ky // s, th), pl.ds(kx // s, wo), :]
            acc = acc + jnp.dot(tap.reshape(th * wo, cin), w_ref[ky * 3 + kx],
                                preferred_element_type=jnp.float32)
    out = acc + b_ref[...]
    if relu:
        out = jnp.maximum(out, 0.0)
    o_ref[...] = out.reshape(1, th, wo, tn).astype(o_ref.dtype)


# ------------------------------ kernel wrappers --------------------------------

def matmul_fused(x, w, bias, *, relu, residual=None, short=None,
                 out_dtype=jnp.bfloat16, tm_target=1024, tn_target=512):
    """act(x @ w + bias [+ residual | + xs @ ws]).  bf16 operands, f32 accumulate.

    K (and the shortcut K) stay whole inside each block (<= 2048 in this module),
    so the grid is (M/tm, N/tn) with both axes parallel (megacore friendly).
    When `relu=True` together with residual/short, ReLU is applied after the add.
    """
    M, K = x.shape
    _, N = w.shape
    x = x.astype(jnp.bfloat16)
    w = w.astype(jnp.bfloat16)
    bias2 = bias.reshape(1, N).astype(jnp.float32)

    tm = _pick_m_tile(M, tm_target)
    pad_m = 0
    if tm is None:                                   # rare fallback: pad M
        tm = 512
        pad_m = (-M) % tm
    tn = _pick_ch_tile(N, tn_target)
    # v7x: make sure both TensorCores get work when the grid would be (1, 1).
    if ((M + pad_m) // tm) * (N // tn) < 2:
        half = _largest_divisor(M + pad_m, tm // 2, 16)
        if half is not None:
            tm = half
    if pad_m:
        x = jnp.pad(x, ((0, pad_m), (0, 0)))
    Mp = M + pad_m

    in_specs = [
        pl.BlockSpec((tm, K), lambda i, j: (i, 0)),
        pl.BlockSpec((K, tn), lambda i, j: (0, j)),
        pl.BlockSpec((1, tn), lambda i, j: (0, j)),
    ]
    args = [x, w, bias2]
    flops = 2 * Mp * K * N
    bytes_accessed = (Mp * K + K * N) * 2 + N * 4 + Mp * N * jnp.dtype(out_dtype).itemsize

    if residual is not None:
        r = residual.astype(jnp.bfloat16)
        if pad_m:
            r = jnp.pad(r, ((0, pad_m), (0, 0)))
        in_specs.append(pl.BlockSpec((tm, tn), lambda i, j: (i, j)))
        args.append(r)
        kernel = functools.partial(_mm_res_kernel, relu=relu)
        bytes_accessed += Mp * N * 2
    elif short is not None:
        xs, ws = short
        Ks = xs.shape[1]
        xs = xs.astype(jnp.bfloat16)
        ws = ws.astype(jnp.bfloat16)
        if pad_m:
            xs = jnp.pad(xs, ((0, pad_m), (0, 0)))
        in_specs.append(pl.BlockSpec((tm, Ks), lambda i, j: (i, 0)))
        in_specs.append(pl.BlockSpec((Ks, tn), lambda i, j: (0, j)))
        args.extend([xs, ws])
        kernel = functools.partial(_mm_dual_kernel, relu=relu)
        flops += 2 * Mp * Ks * N
        bytes_accessed += (Mp * Ks + Ks * N) * 2
    else:
        kernel = functools.partial(_mm_kernel, relu=relu)

    out = pl.pallas_call(
        kernel,
        out_shape=jax.ShapeDtypeStruct((Mp, N), out_dtype),
        grid=(Mp // tm, N // tn),
        in_specs=in_specs,
        out_specs=pl.BlockSpec((tm, tn), lambda i, j: (i, j)),
        compiler_params=pltpu.CompilerParams(
            dimension_semantics=("parallel", "parallel"),
            vmem_limit_bytes=_VMEM_LIMIT),
        cost_estimate=pl.CostEstimate(flops=int(flops), transcendentals=0,
                                      bytes_accessed=int(bytes_accessed)),
    )(*args)
    return out[:M] if pad_m else out


def conv3x3_fused(x, w_hwio, bias, *, stride, relu=True,
                  tn_target=512, m_target=1024):
    """3x3 conv (pad=1, stride in {1,2}) + folded-BN bias + ReLU, NHWC bf16.

    No im2col in HBM: only the padded (and, for stride=2, space-to-depth
    phase-split) activation is written once (~1.13x activation bytes); the
    9-tap reduction runs against the VMEM-resident image inside the kernel.
    """
    N, H, W, Cin = x.shape
    Cout = w_hwio.shape[-1]
    assert stride in (1, 2)
    x = x.astype(jnp.bfloat16)
    xp = jnp.pad(x, ((0, 0), (1, 1), (1, 1), (0, 0)))
    if stride == 1:
        Ho, Wo = H, W
        Hh, Wh = H + 2, W + 2
        xph = xp                                           # (N*1, Hh, Wh, Cin)
    else:
        assert H % 2 == 0 and W % 2 == 0, "stride-2 path assumes even H, W"
        Ho, Wo = H // 2, W // 2
        Hh, Wh = (H + 2) // 2, (W + 2) // 2
        # space-to-depth: xph[n*4 + py*2 + px, hh, wh, c] = xp[n, 2*hh+py, 2*wh+px, c]
        xph = xp.reshape(N, Hh, 2, Wh, 2, Cin)
        xph = jnp.transpose(xph, (0, 2, 4, 1, 3, 5)).reshape(N * 4, Hh, Wh, Cin)

    ss = stride * stride
    tn = _pick_ch_tile(Cout, tn_target)
    th = _largest_divisor(Ho, max(1, m_target // Wo), 1) or Ho

    w9 = w_hwio.reshape(9, Cin, Cout).astype(jnp.bfloat16)
    bias2 = bias.reshape(1, Cout).astype(jnp.float32)

    flops = 2 * N * Ho * Wo * 9 * Cin * Cout
    bytes_accessed = (N * ss * Hh * Wh * Cin + 9 * Cin * Cout) * 2 + Cout * 4 \
                     + N * Ho * Wo * Cout * 2

    out = pl.pallas_call(
        functools.partial(_conv3x3_kernel, stride=stride, relu=relu),
        out_shape=jax.ShapeDtypeStruct((N, Ho, Wo, Cout), jnp.bfloat16),
        grid=(N, Ho // th, Cout // tn),
        in_specs=[
            # whole (phase-split) padded image; block index only changes with n,
            # so it is DMA'd once per image and stays resident across r/j steps.
            pl.BlockSpec((ss, Hh, Wh, Cin), lambda n, r, j: (n, 0, 0, 0)),
            pl.BlockSpec((9, Cin, tn), lambda n, r, j: (0, 0, j)),
            pl.BlockSpec((1, tn), lambda n, r, j: (0, j)),
        ],
        out_specs=pl.BlockSpec((1, th, Wo, tn), lambda n, r, j: (n, r, 0, j)),
        compiler_params=pltpu.CompilerParams(
            dimension_semantics=("parallel", "parallel", "parallel"),
            vmem_limit_bytes=_VMEM_LIMIT),
        cost_estimate=pl.CostEstimate(flops=int(flops), transcendentals=0,
                                      bytes_accessed=int(bytes_accessed)),
    )(xph, w9, bias2)
    return out


# ------------------------------ parameters ------------------------------------

def make_convnorm_params(key, cin, cout, ksize):
    """ConvNormLayer (inference): conv weight (HWIO) with BN scale folded in
    (bf16) + remaining per-channel bias (f32)."""
    k1, k2, k3, k4, k5 = jax.random.split(key, 5)
    fan_in = cin * ksize * ksize
    w = jax.random.normal(k1, (ksize, ksize, cin, cout), jnp.float32) / math.sqrt(fan_in)
    gamma = 1.0 + 0.1 * jax.random.normal(k2, (cout,), jnp.float32)
    beta = 0.1 * jax.random.normal(k3, (cout,), jnp.float32)
    mean = 0.1 * jax.random.normal(k4, (cout,), jnp.float32)
    var = jnp.abs(jax.random.normal(k5, (cout,), jnp.float32)) + 1.0
    eps = 1e-5
    scale = gamma / jnp.sqrt(var + eps)
    bias = beta - mean * scale
    return {"w": (w * scale).astype(jnp.bfloat16), "b": bias.astype(jnp.float32)}


def init_bottleneck_params(key, ch_in, ch_out, *, shortcut, base_width=64,
                           groups=1, expansion=4):
    width = int(ch_out * (base_width / 64.0)) * groups
    cexp = ch_out * expansion
    ks = jax.random.split(key, 4)
    p = {
        "branch2a": make_convnorm_params(ks[0], ch_in, width, 1),
        "branch2b": make_convnorm_params(ks[1], width, width, 3),
        "branch2c": make_convnorm_params(ks[2], width, cexp, 1),
    }
    if not shortcut:
        p["short"] = make_convnorm_params(ks[3], ch_in, cexp, 1)
    return p


# ------------------------------ forward (Pallas) -------------------------------

def bottleneck_forward(x, p, *, stride, shortcut):
    """BottleNeck.forward (variant 'b'): NHWC bf16 in -> NHWC bf16 out.
    1x1(s=1,relu) -> 3x3(s=stride,relu) -> [1x1 + shortcut + ReLU] (fused tail)."""
    N, H, W, Cin = x.shape
    x = x.astype(jnp.bfloat16)
    width = p["branch2a"]["w"].shape[-1]
    cexp = p["branch2c"]["w"].shape[-1]

    # branch2a: 1x1 conv + folded BN + ReLU (stride 1 for variant 'b')
    a = matmul_fused(x.reshape(N * H * W, Cin),
                     p["branch2a"]["w"].reshape(Cin, width),
                     p["branch2a"]["b"], relu=True).reshape(N, H, W, width)

    # branch2b: 3x3 conv (pad=1, stride) + BN + ReLU, taps reduced in-kernel
    b = conv3x3_fused(a, p["branch2b"]["w"], p["branch2b"]["b"], stride=stride)
    _, Ho, Wo, _ = b.shape
    M = N * Ho * Wo
    b2d = b.reshape(M, width)

    # tail: branch2c (1x1 + BN) fused with the shortcut add and the final ReLU
    if shortcut:
        assert stride == 1 and Cin == cexp
        out2d = matmul_fused(b2d, p["branch2c"]["w"].reshape(width, cexp),
                             p["branch2c"]["b"], relu=True,
                             residual=x.reshape(M, cexp))
    else:
        xs = x if stride == 1 else x[:, ::stride, ::stride, :]
        out2d = matmul_fused(b2d, p["branch2c"]["w"].reshape(width, cexp),
                             p["branch2c"]["b"] + p["short"]["b"], relu=True,
                             short=(xs.reshape(M, Cin),
                                    p["short"]["w"].reshape(Cin, cexp)))
    return out2d.reshape(N, Ho, Wo, cexp)


# --------------------------- pure-JAX reference --------------------------------
# Precision-matched: bf16 weights/activations at layer boundaries, f32 accumulate.

def _ref_convnorm(x, pp, stride, relu):
    k = pp["w"].shape[0]
    pad = (k - 1) // 2
    y = jax.lax.conv_general_dilated(
        x.astype(jnp.bfloat16), pp["w"], (stride, stride),
        ((pad, pad), (pad, pad)),
        dimension_numbers=("NHWC", "HWIO", "NHWC"),
        preferred_element_type=jnp.float32) + pp["b"]
    return jnp.maximum(y, 0.0) if relu else y


def bottleneck_reference(x, p, *, stride, shortcut):
    """NHWC bf16 in -> NHWC bf16 out."""
    a = _ref_convnorm(x, p["branch2a"], 1, True).astype(jnp.bfloat16)
    b = _ref_convnorm(a, p["branch2b"], stride, True).astype(jnp.bfloat16)
    c = _ref_convnorm(b, p["branch2c"], 1, False)
    if shortcut:
        s = x.astype(jnp.float32)
    else:
        s = _ref_convnorm(x, p["short"], stride, False)
    return jnp.maximum(c + s, 0.0).astype(jnp.bfloat16)


# ----------------------------------- main --------------------------------------

if __name__ == "__main__":
    key = jax.random.PRNGKey(0)
    k_in, ka, kb = jax.random.split(key, 3)

    # Small, module-consistent config (real model: ch_in=1024, ch_out=512, ...).
    N, CH_IN, H, W = 2, 64, 16, 16
    CH_OUT = 32                      # bottleneck width; output channels = 4*CH_OUT
    x_nchw = jax.random.normal(k_in, (N, CH_IN, H, W), jnp.float32)

    # BottleNeck(ch_in=64, ch_out=32, stride=2, shortcut=False, variant='b')
    pA = init_bottleneck_params(ka, CH_IN, CH_OUT, shortcut=False)
    # BottleNeck(ch_in=128, ch_out=32, stride=1, shortcut=True) — identity path
    pB = init_bottleneck_params(kb, CH_OUT * 4, CH_OUT, shortcut=True)

    # Cast to bf16 BEFORE the layout transpose; chain blocks in NHWC bf16.
    x = jnp.transpose(x_nchw.astype(jnp.bfloat16), (0, 2, 3, 1))

    yA = jax.block_until_ready(bottleneck_forward(x, pA, stride=2, shortcut=False))
    yB = jax.block_until_ready(bottleneck_forward(yA, pB, stride=1, shortcut=True))
    out_nchw = jax.block_until_ready(
        jnp.transpose(yB, (0, 3, 1, 2)).astype(jnp.float32))

    rA = jax.block_until_ready(bottleneck_reference(x, pA, stride=2, shortcut=False))
    rB = jax.block_until_ready(bottleneck_reference(yA, pB, stride=1, shortcut=True))

    assert yA.shape == (N, H // 2, W // 2, CH_OUT * 4), yA.shape
    assert out_nchw.shape == (N, CH_OUT * 4, H // 2, W // 2), out_nchw.shape
    np.testing.assert_allclose(np.asarray(yA.astype(jnp.float32)),
                               np.asarray(rA.astype(jnp.float32)),
                               rtol=2e-2, atol=2e-2)
    np.testing.assert_allclose(np.asarray(yB.astype(jnp.float32)),
                               np.asarray(rB.astype(jnp.float32)),
                               rtol=2e-2, atol=2e-2)
    print("KERNEL_OK")
</pallas_src>

<mosaic_0001>
module attributes {stable_mosaic.version = 11 : i64} {
  func.func @_mm_kernel(%arg0: i32, %arg1: i32, %arg2: memref<256x64xbf16, #tpu.memory_space<vmem>>, %arg3: memref<64x32xbf16, #tpu.memory_space<vmem>>, %arg4: memref<1x32xf32, #tpu.memory_space<vmem>>, %arg5: memref<256x32xbf16, #tpu.memory_space<vmem>>) attributes {dimension_semantics = [#tpu.dimension_semantics<parallel>, #tpu.dimension_semantics<parallel>], iteration_bounds = array<i64: 2, 1>, scalar_prefetch = 0 : i64, scratch_operands = 0 : i64, tpu.core_type = #tpu.core_type<tc>, window_params = [{transform_indices = @transform_0, window_bounds = array<i64: 256, 64>}, {transform_indices = @transform_1, window_bounds = array<i64: 64, 32>}, {transform_indices = @transform_2, window_bounds = array<i64: 1, 32>}, {transform_indices = @transform_3, window_bounds = array<i64: 256, 32>}]} {
    %c0 = arith.constant 0 : index
    %c0_0 = arith.constant 0 : index
    %0 = vector.load %arg2[%c0, %c0_0] : memref<256x64xbf16, #tpu.memory_space<vmem>>, vector<256x64xbf16>
    %c0_1 = arith.constant 0 : index
    %c0_2 = arith.constant 0 : index
    %1 = vector.load %arg3[%c0_1, %c0_2] : memref<64x32xbf16, #tpu.memory_space<vmem>>, vector<64x32xbf16>
    %cst = arith.constant dense<0.000000e+00> : vector<256x32xf32>
    %2 = tpu.matmul %0, %1, %cst {dimension_numbers = #tpu.dot_dimension_numbers<[1], [0], [0], [1], [0, 0, 1, 1], [], []>} : vector<256x64xbf16>, vector<64x32xbf16>, vector<256x32xf32> -> vector<256x32xf32>
    %c0_3 = arith.constant 0 : index
    %c0_4 = arith.constant 0 : index
    %3 = vector.load %arg4[%c0_3, %c0_4] : memref<1x32xf32, #tpu.memory_space<vmem>>, vector<1x32xf32>
    %4 = vector.broadcast %3 : vector<1x32xf32> to vector<256x32xf32>
    %5 = arith.addf %2, %4 : vector<256x32xf32>
    %cst_5 = arith.constant 0.000000e+00 : f32
    %6 = vector.broadcast %cst_5 : f32 to vector<256x32xf32>
    %7 = arith.maximumf %5, %6 : vector<256x32xf32>
    %8 = arith.truncf %7 : vector<256x32xf32> to vector<256x32xbf16>
    %c0_6 = arith.constant 0 : index
    %c0_7 = arith.constant 0 : index
    %9 = vector.load %arg5[%c0_6, %c0_7] : memref<256x32xbf16, #tpu.memory_space<vmem>>, vector<256x32xbf16>
    tpu.vector_store %arg5[%c0_6, %c0_7], %8 {strides = array<i32>} : memref<256x32xbf16, #tpu.memory_space<vmem>>, vector<256x32xbf16>,
    return
  }
  func.func @transform_0(%arg0: i32, %arg1: i32) -> (i32, i32) {
    %c0_i32 = arith.constant 0 : i32
    %c0_i32_0 = arith.constant 0 : i32
    return %arg0, %c0_i32 : i32, i32
  }
  func.func @transform_1(%arg0: i32, %arg1: i32) -> (i32, i32) {
    %c0_i32 = arith.constant 0 : i32
    %c0_i32_0 = arith.constant 0 : i32
    return %c0_i32, %arg1 : i32, i32
  }
  func.func @transform_2(%arg0: i32, %arg1: i32) -> (i32, i32) {
    %c0_i32 = arith.constant 0 : i32
    %c0_i32_0 = arith.constant 0 : i32
    return %c0_i32, %arg1 : i32, i32
  }
  func.func @transform_3(%arg0: i32, %arg1: i32) -> (i32, i32) {
    %c0_i32 = arith.constant 0 : i32
    return %arg0, %arg1 : i32, i32
  }
}

</mosaic_0001>

<llo_original>
// kernel: tpu_custom_call.1
$region0: #{tpu_custom_call.1}
  #allocation0 [shape = 'u32[]', space=smem, size = 0x4, offset = 0x4, fixed_abs, tag = 'smem constant byte address 0x4 - core index']
  #allocation1 [shape = 'u32[144,128]{1,0:T(1,128)}', space=vmem, size = 0x12000, scoped, tag = 'internal scratch']
  %s0 = inlined_call_operand.vmem [shape: bf16[512,64], index: 0, kind: input, shape index: {}]
  %s1 = inlined_call_operand.vmem [shape: bf16[64,32], index: 1, kind: input, shape index: {}]
  %s2 = inlined_call_operand.vmem [shape: f32[1,32], index: 2, kind: input, shape index: {}]
  %s3 = inlined_call_operand.vmem [shape: bf16[512,32], index: 3, kind: output, shape index: {}]
  %s4 = sld [smem:[#allocation0]]
  $region45: #{tpu_custom_call.1} parent=0
    _
  %s6 = ssub.s32 1, %s4
  %s7 = scalar_select 0, %s6, %s4
  loop: start=0, step=1, limit=4
  $region2: #{tpu_custom_call.1} parent=0 // loop_pre_header
    _
  $region3: #{tpu_custom_call.1} parent=0 // loop_header
    %s9 = sphi 0, %s13
    %p10 = scmp.ge.s32.totalorder %s9, 4
    %s16 = sphi 0, %s28
    %s17 = sphi 0, %s24
    %s18 = sphi 0, %s16
    %s19 = sphi 0, %s17
    %s20 = sphi 0, %s18
    %s21 = sphi 0, %s19
    %s31 = sphi 0, %s33
    %s34 = sphi 0, %s31
    %s35 = sphi 0, %s34
    %s51 = sphi 0, %s35
    %s57 = sphi 0, %s59
    %s60 = sphi 0, %s57
    %s61 = sphi 0, %s60
    %s77 = sphi 0, %s61
    %s83 = sphi 0, %s85
    %s86 = sphi 0, %s83
    %s87 = sphi 0, %s86
    %s103 = sphi 0, %s87
    %s111 = sphi 0, %s113
    %s114 = sphi 0, %s111
    %s115 = sphi 0, %s114
    %s131 = sphi 0, %s115
  $region4: #{tpu_custom_call.1} parent=0 // loop_header_branch
    %12 = sbr.rel (%p10) target = $region8
  $region5: #{tpu_custom_call.1} parent=0 // loop_body
    %s14 = ssub.s32 %s9, 1
    %s15 = ssub.s32 %s9, 2
    %s22 = sadd.s32 1, %s17
    %p23 = scmp.ge.s32.totalorder %s22, 1
    %s24 = scalar_select %p23, 0, %s22
    %s25 = sadd.s32 1, %s16
    %s26 = scalar_select %p23, %s25, %s16
    %p27 = scmp.ge.s32.totalorder %s26, 2
    %s28 = scalar_select %p27, 0, %s26
    %s29 = ssub.s32 %s16, %s28
    %p30 = scmp.eq.s32.totalorder %s29, 0
    %s32 = sadd.s32 %s31, 1
    %s33 = scalar_select %p30, %s31, %s32
    %p36 = pneg %p30
    %p37 = scmp.eq.s32.totalorder %s9, 1
    %p38 = por %p36, %p37
    %p39 = scmp.ne.s32.totalorder %s31, %s34
    %p40 = scmp.eq.s32.totalorder %s9, 0
    %p41 = por %p39, %p40
    %p42 = scmp.ne.s32.totalorder %s31, %s34
    %p43 = scmp.eq.s32.totalorder %s14, 1
    %p44 = por %p42, %p43
    %p45 = scmp.ne.s32.totalorder %s34, %s35
    %p46 = scmp.eq.s32.totalorder %s14, 0
    %p47 = por %p45, %p46
    %p48 = scmp.ne.s32.totalorder %s34, %s35
    %p49 = scmp.eq.s32.totalorder %s15, 1
    %p50 = por %p48, %p49
    %p52 = scmp.ne.s32.totalorder %s35, %s51
    %p53 = scmp.eq.s32.totalorder %s15, 0
    %p54 = por %p52, %p53
    %s55 = ssub.s32 %s17, %s24
    %p56 = scmp.eq.s32.totalorder %s55, 0
    %s58 = sadd.s32 %s57, 1
    %s59 = scalar_select %p56, %s57, %s58
    %p62 = pneg %p56
    %p63 = scmp.eq.s32.totalorder %s9, 1
    %p64 = por %p62, %p63
    %p65 = scmp.ne.s32.totalorder %s57, %s60
    %p66 = scmp.eq.s32.totalorder %s9, 0
    %p67 = por %p65, %p66
    %p68 = scmp.ne.s32.totalorder %s57, %s60
    %p69 = scmp.eq.s32.totalorder %s14, 1
    %p70 = por %p68, %p69
    %p71 = scmp.ne.s32.totalorder %s60, %s61
    %p72 = scmp.eq.s32.totalorder %s14, 0
    %p73 = por %p71, %p72
    %p74 = scmp.ne.s32.totalorder %s60, %s61
    %p75 = scmp.eq.s32.totalorder %s15, 1
    %p76 = por %p74, %p75
    %p78 = scmp.ne.s32.totalorder %s61, %s77
    %p79 = scmp.eq.s32.totalorder %s15, 0
    %p80 = por %p78, %p79
    %s81 = ssub.s32 %s17, %s24
    %p82 = scmp.eq.s32.totalorder %s81, 0
    %s84 = sadd.s32 %s83, 1
    %s85 = scalar_select %p82, %s83, %s84
    %p88 = pneg %p82
    %p89 = scmp.eq.s32.totalorder %s9, 1
    %p90 = por %p88, %p89
    %p91 = scmp.ne.s32.totalorder %s83, %s86
    %p92 = scmp.eq.s32.totalorder %s9, 0
    %p93 = por %p91, %p92
    %p94 = scmp.ne.s32.totalorder %s83, %s86
    %p95 = scmp.eq.s32.totalorder %s14, 1
    %p96 = por %p94, %p95
    %p97 = scmp.ne.s32.totalorder %s86, %s87
    %p98 = scmp.eq.s32.totalorder %s14, 0
    %p99 = por %p97, %p98
    %p100 = scmp.ne.s32.totalorder %s86, %s87
    %p101 = scmp.eq.s32.totalorder %s15, 1
    %p102 = por %p100, %p101
    %p104 = scmp.ne.s32.totalorder %s87, %s103
    %p105 = scmp.eq.s32.totalorder %s15, 0
    %p106 = por %p104, %p105
    %s107 = ssub.s32 %s16, %s28
    %s108 = ssub.s32 %s17, %s24
    %s109 = sor.u32 %s107, %s108
    %p110 = scmp.eq.s32.totalorder %s109, 0
    %s112 = sadd.s32 %s111, 1
    %s113 = scalar_select %p110, %s111, %s112
    %p116 = pneg %p110
    %p117 = scmp.eq.s32.totalorder %s9, 1
    %p118 = por %p116, %p117
    %p119 = scmp.ne.s32.totalorder %s111, %s114
    %p120 = scmp.eq.s32.totalorder %s9, 0
    %p121 = por %p119, %p120
    %p122 = scmp.ne.s32.totalorder %s111, %s114
    %p123 = scmp.eq.s32.totalorder %s14, 1
    %p124 = por %p122, %p123
    %p125 = scmp.ne.s32.totalorder %s114, %s115
    %p126 = scmp.eq.s32.totalorder %s14, 0
    %p127 = por %p125, %p126
    %p128 = scmp.ne.s32.totalorder %s114, %s115
    %p129 = scmp.eq.s32.totalorder %s15, 1
    %p130 = por %p128, %p129
    %p132 = scmp.ne.s32.totalorder %s115, %s131
    %p133 = scmp.eq.s32.totalorder %s15, 0
    %p134 = por %p132, %p133
    %p135 = scmp.le.s32.totalorder 1, %s9
    %p136 = scmp.lt.s32.totalorder %s9, 3
    %p137 = pnand %p135, %p136
    %p138 = pneg %p137
    // Predicated region
    $region9: #{tpu_custom_call.1} parent=5 // pred_check
      _
    $region10: #{tpu_custom_call.1} parent=5 // pred_check_branch
      %140 = sbr.rel (%p137) target = $region12
    $region11: #{tpu_custom_call.1} parent=5 // pred_region
      %s141 = ssub.s32 %s9, 1
      // Predicated region
      $region13: #{tpu_custom_call.1} parent=11 // pred_check
        %p142 = pneg %p73
      $region14: #{tpu_custom_call.1} parent=11 // pred_check_branch
        %144 = sbr.rel (%p142) target = $region16
      $region15: #{tpu_custom_call.1} parent=11 // pred_region
        %p145 = scmp.lt.s32.totalorder %s19, 0
        %s146 = scalar_select %p145, %s19, 0
        %s147 = smul.addr %s146, 4
        %s148 = scalar_lea.vmem %s1, %s147
      $region16: #{tpu_custom_call.1} parent=11 // pred_fallthru
        _
      // Predicated region
      $region17: #{tpu_custom_call.1} parent=11 // pred_check
        %p149 = pneg %p99
      $region18: #{tpu_custom_call.1} parent=11 // pred_check_branch
        %151 = sbr.rel (%p149) target = $region20
      $region19: #{tpu_custom_call.1} parent=11 // pred_region
        %p152 = scmp.lt.s32.totalorder %s19, 0
        %s153 = scalar_select %p152, %s19, 0
        %s154 = scalar_lea.vmem %s2, %s153
      $region20: #{tpu_custom_call.1} parent=11 // pred_fallthru
        _
    $region12: #{tpu_custom_call.1} parent=5 // pred_fallthru
      _
    %p155 = scmp.lt.s32.totalorder %s9, 2
    // Predicated region
    $region21: #{tpu_custom_call.1} parent=5 // pred_check
      %p156 = pneg %p155
    $region22: #{tpu_custom_call.1} parent=5 // pred_check_branch
      %158 = sbr.rel (%p156) target = $region24
    $region23: #{tpu_custom_call.1} parent=5 // pred_region
      // Predicated region
      $region25: #{tpu_custom_call.1} parent=23 // pred_check
        %p159 = pneg %p41
      $region26: #{tpu_custom_call.1} parent=23 // pred_check_branch
        %161 = sbr.rel (%p159) target = $region28
      $region27: #{tpu_custom_call.1} parent=23 // pred_region
        %s162 = smul.u32 32, %s16
        %p163 = scmp.lt.s32.totalorder %s162, 63
        %s164 = scalar_select %p163, %s162, 63
        %s165 = smul.addr %s164, 4
        %s166 = scalar_lea.vmem %s0, %s165
        %s167 = smul.u32 32, %s16
      $region28: #{tpu_custom_call.1} parent=23 // pred_fallthru
        _
    $region24: #{tpu_custom_call.1} parent=5 // pred_fallthru
      _
    %p168 = scmp.le.s32.totalorder 1, %s9
    %p169 = scmp.lt.s32.totalorder %s9, 3
    %p170 = pnand %p168, %p169
    %p171 = pneg %p170
    // Predicated region
    $region29: #{tpu_custom_call.1} parent=5 // pred_check
      _
    $region30: #{tpu_custom_call.1} parent=5 // pred_check_branch
      %173 = sbr.rel (%p170) target = $region32
    $region31: #{tpu_custom_call.1} parent=5 // pred_region
      %s174 = ssub.s32 %s9, 1
      %s175 = smul.u32 32, %s18
      %p176 = scmp.lt.s32.totalorder %s175, 63
      %s177 = scalar_select %p176, %s175, 63
      %s178 = smul.addr %s177, 4
      %s179 = scalar_lea.vmem %s0, %s178
      %p180 = pneg %p47
      %p181 = pneg %p44
      %p182 = scmp.lt.s32.totalorder %s19, 0
      %s183 = scalar_select %p182, %s19, 0
      %s184 = smul.addr %s183, 4
      %s185 = scalar_lea.vmem %s1, %s184
      %p186 = pneg %p73
      %p187 = pneg %p70
      %p188 = scmp.lt.s32.totalorder %s19, 0
      %s189 = scalar_select %p188, %s19, 0
      %s190 = scalar_lea.vmem %s2, %s189
      %p191 = pneg %p99
      %p192 = pneg %p96
      %p193 = pneg %p127
      %p194 = pneg %p124
      %s195 = smul.u32 32, %s18
      %p196 = scmp.lt.s32.totalorder %s195, 63
      %s197 = scalar_select %p196, %s195, 63
      %p198 = scmp.lt.s32.totalorder %s19, 0
      %s199 = scalar_select %p198, %s19, 0
      %s200 = sadd.s32 %s199, %s197
      %s201 = smul.addr %s200, 4
      %s202 = scalar_lea.vmem %s3, %s201
      %s203 = smul.u32 32, %s18
      %p204 = scmp.lt.s32.totalorder %s203, 63
      %s205 = scalar_select %p204, %s203, 63
      %s206 = smul.addr %s205, 4
      %s207 = scalar_lea.vmem %s0, %s206
      %s208 = smul.u32 32, %s18
      %p209 = scmp.lt.s32.totalorder %s19, 0
      %s210 = scalar_select %p209, %s19, 0
      %s211 = smul.addr %s210, 4
      %s212 = scalar_lea.vmem %s1, %s211
      %p213 = scmp.lt.s32.totalorder %s19, 0
      %s214 = scalar_select %p213, %s19, 0
      %s215 = scalar_lea.vmem %s2, %s214
      %s216 = smul.u32 32, %s18
      %p217 = scmp.lt.s32.totalorder %s216, 63
      %s218 = scalar_select %p217, %s216, 63
      %p219 = scmp.lt.s32.totalorder %s19, 0
      %s220 = scalar_select %p219, %s19, 0
      %s221 = sadd.s32 %s220, %s218
      %s222 = smul.addr %s221, 4
      %s223 = scalar_lea.vmem %s3, %s222
      %s224 = smul.u32 32, %s18
      %v226 = vld [vmem:[%s207] sm:$0xf]
      %v227 = vld [vmem:[%s207 + $0x4] sm:$0xf]
      %v228 = vld [vmem:[%s207 + $0x8] sm:$0xf]
      %v229 = vld [vmem:[%s207 + $0xc] sm:$0xf]
      %v230 = vld [vmem:[%s207 + $0x10] sm:$0xf]
      %v231 = vld [vmem:[%s207 + $0x14] sm:$0xf]
      %v232 = vld [vmem:[%s207 + $0x18] sm:$0xf]
      %v233 = vld [vmem:[%s207 + $0x1c] sm:$0xf]
      %v234 = vld [vmem:[%s207 + $0x20] sm:$0xf]
      %v235 = vld [vmem:[%s207 + $0x24] sm:$0xf]
      %v236 = vld [vmem:[%s207 + $0x28] sm:$0xf]
      %v237 = vld [vmem:[%s207 + $0x2c] sm:$0xf]
      %v238 = vld [vmem:[%s207 + $0x30] sm:$0xf]
      %v239 = vld [vmem:[%s207 + $0x34] sm:$0xf]
      %v240 = vld [vmem:[%s207 + $0x38] sm:$0xf]
      %v241 = vld [vmem:[%s207 + $0x3c] sm:$0xf]
      %v242 = vld [vmem:[%s207 + $0x40] sm:$0xf]
      %v243 = vld [vmem:[%s207 + $0x44] sm:$0xf]
      %v244 = vld [vmem:[%s207 + $0x48] sm:$0xf]
      %v245 = vld [vmem:[%s207 + $0x4c] sm:$0xf]
      %v246 = vld [vmem:[%s207 + $0x50] sm:$0xf]
      %v247 = vld [vmem:[%s207 + $0x54] sm:$0xf]
      %v248 = vld [vmem:[%s207 + $0x58] sm:$0xf]
      %v249 = vld [vmem:[%s207 + $0x5c] sm:$0xf]
      %v250 = vld [vmem:[%s207 + $0x60] sm:$0xf]
      %v251 = vld [vmem:[%s207 + $0x64] sm:$0xf]
      %v252 = vld [vmem:[%s207 + $0x68] sm:$0xf]
      %v253 = vld [vmem:[%s207 + $0x6c] sm:$0xf]
      %v254 = vld [vmem:[%s207 + $0x70] sm:$0xf]
      %v255 = vld [vmem:[%s207 + $0x74] sm:$0xf]
      %v256 = vld [vmem:[%s207 + $0x78] sm:$0xf]
      %v257 = vld [vmem:[%s207 + $0x7c] sm:$0xf]
      %v258 = vld [vmem:[%s212] sm:$0xf]
      %v259 = vld [vmem:[%s212 + $0x4] sm:$0xf]
      %v260 = vld [vmem:[%s212 + $0x8] sm:$0xf]
      %v261 = vld [vmem:[%s212 + $0xc] sm:$0xf]
      %v262 = vld [vmem:[%s212 + $0x10] sm:$0xf]
      %v263 = vld [vmem:[%s212 + $0x14] sm:$0xf]
      %v264 = vld [vmem:[%s212 + $0x18] sm:$0xf]
      %v265 = vld [vmem:[%s212 + $0x1c] sm:$0xf]
      %v266 = vld [vmem:[%s215] sm:$0x1]
      %v268 = vlaneseq
      %v269 = vshrl.u32 %v268, 7
      %v270 = vsub.s32 0, %v269
      %v271 = vrot.slane %v266, %v270
      %v305 = vunpack.c.l.b16 %v226
      %v306 = vunpack.c.l.b16 %v227
      %v307 = vunpack.c.l.b16 %v228
      %v308 = vunpack.c.l.b16 %v229
      %v309 = vunpack.c.l.b16 %v230
      %v310 = vunpack.c.l.b16 %v231
      %v311 = vunpack.c.l.b16 %v232
      %v312 = vunpack.c.l.b16 %v233
      %v313 = vunpack.c.l.b16 %v234
      %v314 = vunpack.c.l.b16 %v235
      %v315 = vunpack.c.l.b16 %v236
      %v316 = vunpack.c.l.b16 %v237
      %v317 = vunpack.c.l.b16 %v238
      %v318 = vunpack.c.l.b16 %v239
      %v319 = vunpack.c.l.b16 %v240
      %v320 = vunpack.c.l.b16 %v241
      %v321 = vunpack.c.l.b16 %v242
      %v322 = vunpack.c.l.b16 %v243
      %v323 = vunpack.c.l.b16 %v244
      %v324 = vunpack.c.l.b16 %v245
      %v325 = vunpack.c.l.b16 %v246
      %v326 = vunpack.c.l.b16 %v247
      %v327 = vunpack.c.l.b16 %v248
      %v328 = vunpack.c.l.b16 %v249
      %v329 = vunpack.c.l.b16 %v250
      %v330 = vunpack.c.l.b16 %v251
      %v331 = vunpack.c.l.b16 %v252
      %v332 = vunpack.c.l.b16 %v253
      %v333 = vunpack.c.l.b16 %v254
      %v334 = vunpack.c.l.b16 %v255
      %v335 = vunpack.c.l.b16 %v256
      %v336 = vunpack.c.l.b16 %v257
      %v337 = vpack.c.b16 %v306, %v305
      %v338 = vpack.c.b16 %v308, %v307
      %v339 = vpack.c.b16 %v310, %v309
      %v340 = vpack.c.b16 %v312, %v311
      %v341 = vpack.c.b16 %v314, %v313
      %v342 = vpack.c.b16 %v316, %v315
      %v343 = vpack.c.b16 %v318, %v317
      %v344 = vpack.c.b16 %v320, %v319
      %v345 = vpack.c.b16 %v322, %v321
      %v346 = vpack.c.b16 %v324, %v323
      %v347 = vpack.c.b16 %v326, %v325
      %v348 = vpack.c.b16 %v328, %v327
      %v349 = vpack.c.b16 %v330, %v329
      %v350 = vpack.c.b16 %v332, %v331
      %v351 = vpack.c.b16 %v334, %v333
      %v352 = vpack.c.b16 %v336, %v335
      %v361 = vunpack.c.l.b16 %v258
      %v362 = vunpack.c.l.b16 %v259
      %v363 = vunpack.c.l.b16 %v260
      %v364 = vunpack.c.l.b16 %v261
      %v365 = vunpack.c.l.b16 %v262
      %v366 = vunpack.c.l.b16 %v263
      %v367 = vunpack.c.l.b16 %v264
      %v368 = vunpack.c.l.b16 %v265
      %v369 = vpack.c.b16 %v362, %v361
      %v370 = vpack.c.b16 %v364, %v363
      %v371 = vpack.c.b16 %v366, %v365
      %v372 = vpack.c.b16 %v368, %v367
      %vm377 = vcmask 523264
      %v379 = vsel %vm377, %v337, 0
      %v382 = vsel %vm377, %v338, 0
      %v385 = vsel %vm377, %v339, 0
      %v388 = vsel %vm377, %v340, 0
      %v391 = vsel %vm377, %v341, 0
      %v394 = vsel %vm377, %v342, 0
      %v397 = vsel %vm377, %v343, 0
      %v400 = vsel %vm377, %v344, 0
      %v403 = vsel %vm377, %v345, 0
      %v406 = vsel %vm377, %v346, 0
      %v409 = vsel %vm377, %v347, 0
      %v412 = vsel %vm377, %v348, 0
      %v415 = vsel %vm377, %v349, 0
      %v418 = vsel %vm377, %v350, 0
      %v421 = vsel %vm377, %v351, 0
      %v424 = vsel %vm377, %v352, 0
      %426 = vmatprep.subr.bf16.mxu0 0
      %427 = vmatpush1.bf16.msra.mxu0 %v369
      %428 = vmatprep.subr.bf16.mxu0 0
      %429 = vmatpush1.bf16.msra.mxu0 %v370
      %430 = vmatprep.subr.bf16.mxu0 0
      %431 = vmatpush1.bf16.msra.mxu0 %v371
      %432 = vmatprep.subr.bf16.mxu0 0
      %433 = vmatpush1.bf16.msra.mxu0 %v372
      %434 = vmatprep.subr.bf16.mxu0 0
      %435 = vmatpush1.bf16.msra.mxu0 0
      %436 = vmatprep.subr.bf16.mxu0 0
      %437 = vmatpush1.bf16.msra.mxu0 0
      %438 = vmatprep.subr.bf16.mxu0 0
      %439 = vmatpush1.bf16.msra.mxu0 0
      %440 = vmatprep.subr.bf16.mxu0 0
      %441 = vmatpush1.bf16.msra.mxu0 0
      %442 = vmatprep.subr.bf16.mxu0 0
      %443 = vmatpush1.bf16.msra.mxu0 0
      %444 = vmatprep.subr.bf16.mxu0 0
      %445 = vmatpush1.bf16.msra.mxu0 0
      %446 = vmatprep.subr.bf16.mxu0 0
      %447 = vmatpush1.bf16.msra.mxu0 0
      %448 = vmatprep.subr.bf16.mxu0 0
      %449 = vmatpush1.bf16.msra.mxu0 0
      %450 = vmatprep.subr.bf16.mxu0 0
      %451 = vmatpush1.bf16.msra.mxu0 0
      %452 = vmatprep.subr.bf16.mxu0 0
      %453 = vmatpush1.bf16.msra.mxu0 0
      %454 = vmatprep.subr.bf16.mxu0 0
      %455 = vmatpush1.bf16.msra.mxu0 0
      %456 = vmatprep.subr.bf16.mxu0 0
      %457 = vmatpush1.bf16.msra.mxu0 0
      %458 = vmatprep.mubr.bf16.mxu0 0
      %459 = vmatmul.mubr.bf16.gmra.mrb[0].mxu0 %v379
      %v460 = vpop.f32.mrb[0].mxu0
      %v461 = vadd.f32 %v271, %v460
      %v462 = vpop.f32.mrb[0].mxu0
      %v463 = vpop.f32.mrb[0].mxu0
      %v464 = vadd.f32 %v271, %v463
      %v465 = vpop.f32.mrb[0].mxu0
      %466 = vmatprep.mubr.bf16.mxu0 0
      %467 = vmatmul.mubr.bf16.gmra.mrb[0].mxu0 %v382
      %v468 = vpop.f32.mrb[0].mxu0
      %v469 = vadd.f32 %v271, %v468
      %v470 = vpop.f32.mrb[0].mxu0
      %v471 = vpop.f32.mrb[0].mxu0
      %v472 = vadd.f32 %v271, %v471
      %v473 = vpop.f32.mrb[0].mxu0
      %474 = vmatprep.mubr.bf16.mxu0 0
      %475 = vmatmul.mubr.bf16.gmra.mrb[0].mxu0 %v385
      %v476 = vpop.f32.mrb[0].mxu0
      %v477 = vadd.f32 %v271, %v476
      %v478 = vpop.f32.mrb[0].mxu0
      %v479 = vpop.f32.mrb[0].mxu0
      %v480 = vadd.f32 %v271, %v479
      %v481 = vpop.f32.mrb[0].mxu0
      %482 = vmatprep.mubr.bf16.mxu0 0
      %483 = vmatmul.mubr.bf16.gmra.mrb[0].mxu0 %v388
      %v484 = vpop.f32.mrb[0].mxu0
      %v485 = vadd.f32 %v271, %v484
      %v486 = vpop.f32.mrb[0].mxu0
      %v487 = vpop.f32.mrb[0].mxu0
      %v488 = vadd.f32 %v271, %v487
      %v489 = vpop.f32.mrb[0].mxu0
      %490 = vmatprep.mubr.bf16.mxu0 0
      %491 = vmatmul.mubr.bf16.gmra.mrb[0].mxu0 %v391
      %v492 = vpop.f32.mrb[0].mxu0
      %v493 = vadd.f32 %v271, %v492
      %v494 = vpop.f32.mrb[0].mxu0
      %v495 = vpop.f32.mrb[0].mxu0
      %v496 = vadd.f32 %v271, %v495
      %v497 = vpop.f32.mrb[0].mxu0
      %498 = vmatprep.mubr.bf16.mxu0 0
      %499 = vmatmul.mubr.bf16.gmra.mrb[0].mxu0 %v394
      %v500 = vpop.f32.mrb[0].mxu0
      %v501 = vadd.f32 %v271, %v500
      %v502 = vpop.f32.mrb[0].mxu0
      %v503 = vpop.f32.mrb[0].mxu0
      %v504 = vadd.f32 %v271, %v503
      %v505 = vpop.f32.mrb[0].mxu0
      %506 = vmatprep.mubr.bf16.mxu0 0
      %507 = vmatmul.mubr.bf16.gmra.mrb[0].mxu0 %v397
      %v508 = vpop.f32.mrb[0].mxu0
      %v509 = vadd.f32 %v271, %v508
      %v510 = vpop.f32.mrb[0].mxu0
      %v511 = vpop.f32.mrb[0].mxu0
      %v512 = vadd.f32 %v271, %v511
      %v513 = vpop.f32.mrb[0].mxu0
      %514 = vmatprep.mubr.bf16.mxu0 0
      %515 = vmatmul.mubr.bf16.gmra.mrb[0].mxu0 %v400
      %v516 = vpop.f32.mrb[0].mxu0
      %v517 = vadd.f32 %v271, %v516
      %v518 = vpop.f32.mrb[0].mxu0
      %v519 = vpop.f32.mrb[0].mxu0
      %v520 = vadd.f32 %v271, %v519
      %v521 = vpop.f32.mrb[0].mxu0
      %522 = vmatprep.mubr.bf16.mxu0 0
      %523 = vmatmul.mubr.bf16.gmra.mrb[0].mxu0 %v403
      %v524 = vpop.f32.mrb[0].mxu0
      %v525 = vadd.f32 %v271, %v524
      %v526 = vpop.f32.mrb[0].mxu0
      %v527 = vpop.f32.mrb[0].mxu0
      %v528 = vadd.f32 %v271, %v527
      %v529 = vpop.f32.mrb[0].mxu0
      %530 = vmatprep.mubr.bf16.mxu0 0
      %531 = vmatmul.mubr.bf16.gmra.mrb[0].mxu0 %v406
      %v532 = vpop.f32.mrb[0].mxu0
      %v533 = vadd.f32 %v271, %v532
      %v534 = vpop.f32.mrb[0].mxu0
      %v535 = vpop.f32.mrb[0].mxu0
      %v536 = vadd.f32 %v271, %v535
      %v537 = vpop.f32.mrb[0].mxu0
      %538 = vmatprep.mubr.bf16.mxu0 0
      %539 = vmatmul.mubr.bf16.gmra.mrb[0].mxu0 %v409
      %v540 = vpop.f32.mrb[0].mxu0
      %v541 = vadd.f32 %v271, %v540
      %v542 = vpop.f32.mrb[0].mxu0
      %v543 = vpop.f32.mrb[0].mxu0
      %v544 = vadd.f32 %v271, %v543
      %v545 = vpop.f32.mrb[0].mxu0
      %546 = vmatprep.mubr.bf16.mxu0 0
      %547 = vmatmul.mubr.bf16.gmra.mrb[0].mxu0 %v412
      %v548 = vpop.f32.mrb[0].mxu0
      %v549 = vadd.f32 %v271, %v548
      %v550 = vpop.f32.mrb[0].mxu0
      %v551 = vpop.f32.mrb[0].mxu0
      %v552 = vadd.f32 %v271, %v551
      %v553 = vpop.f32.mrb[0].mxu0
      %554 = vmatprep.mubr.bf16.mxu0 0
      %555 = vmatmul.mubr.bf16.gmra.mrb[0].mxu0 %v415
      %v556 = vpop.f32.mrb[0].mxu0
      %v557 = vadd.f32 %v271, %v556
      %v558 = vpop.f32.mrb[0].mxu0
      %v559 = vpop.f32.mrb[0].mxu0
      %v560 = vadd.f32 %v271, %v559
      %v561 = vpop.f32.mrb[0].mxu0
      %562 = vmatprep.mubr.bf16.mxu0 0
      %563 = vmatmul.mubr.bf16.gmra.mrb[0].mxu0 %v418
      %v564 = vpop.f32.mrb[0].mxu0
      %v565 = vadd.f32 %v271, %v564
      %v566 = vpop.f32.mrb[0].mxu0
      %v567 = vpop.f32.mrb[0].mxu0
      %v568 = vadd.f32 %v271, %v567
      %v569 = vpop.f32.mrb[0].mxu0
      %570 = vmatprep.mubr.bf16.mxu0 0
      %571 = vmatmul.mubr.bf16.gmra.mrb[0].mxu0 %v421
      %v572 = vpop.f32.mrb[0].mxu0
      %v573 = vadd.f32 %v271, %v572
      %v574 = vpop.f32.mrb[0].mxu0
      %v575 = vpop.f32.mrb[0].mxu0
      %v576 = vadd.f32 %v271, %v575
      %v577 = vpop.f32.mrb[0].mxu0
      %578 = vmatprep.mubr.bf16.mxu0 0
      %579 = vmatmul.mubr.bf16.gmra.mrb[0].mxu0 %v424
      %v580 = vpop.f32.mrb[0].mxu0
      %v581 = vadd.f32 %v271, %v580
      %v582 = vpop.f32.mrb[0].mxu0
      %v583 = vpop.f32.mrb[0].mxu0
      %v584 = vadd.f32 %v271, %v583
      %v585 = vpop.f32.mrb[0].mxu0
      %586 = vdwg.mxu0
      %v587 = vmax.f32 %v461, 0.0
      %v588 = vmax.f32 %v464, 0.0
      %v589 = vmax.f32 %v469, 0.0
      %v590 = vmax.f32 %v472, 0.0
      %v591 = vmax.f32 %v477, 0.0
      %v592 = vmax.f32 %v480, 0.0
      %v593 = vmax.f32 %v485, 0.0
      %v594 = vmax.f32 %v488, 0.0
      %v595 = vmax.f32 %v493, 0.0
      %v596 = vmax.f32 %v496, 0.0
      %v597 = vmax.f32 %v501, 0.0
      %v598 = vmax.f32 %v504, 0.0
      %v599 = vmax.f32 %v509, 0.0
      %v600 = vmax.f32 %v512, 0.0
      %v601 = vmax.f32 %v517, 0.0
      %v602 = vmax.f32 %v520, 0.0
      %v603 = vmax.f32 %v525, 0.0
      %v604 = vmax.f32 %v528, 0.0
      %v605 = vmax.f32 %v533, 0.0
      %v606 = vmax.f32 %v536, 0.0
      %v607 = vmax.f32 %v541, 0.0
      %v608 = vmax.f32 %v544, 0.0
      %v609 = vmax.f32 %v549, 0.0
      %v610 = vmax.f32 %v552, 0.0
      %v611 = vmax.f32 %v557, 0.0
      %v612 = vmax.f32 %v560, 0.0
      %v613 = vmax.f32 %v565, 0.0
      %v614 = vmax.f32 %v568, 0.0
      %v615 = vmax.f32 %v573, 0.0
      %v616 = vmax.f32 %v576, 0.0
      %v617 = vmax.f32 %v581, 0.0
      %v618 = vmax.f32 %v584, 0.0
      %v619 = vpack.c.bf16 %v588, %v587
      %v620 = vpack.c.bf16 %v590, %v589
      %v621 = vpack.c.bf16 %v592, %v591
      %v622 = vpack.c.bf16 %v594, %v593
      %v623 = vpack.c.bf16 %v596, %v595
      %v624 = vpack.c.bf16 %v598, %v597
      %v625 = vpack.c.bf16 %v600, %v599
      %v626 = vpack.c.bf16 %v602, %v601
      %v627 = vpack.c.bf16 %v604, %v603
      %v628 = vpack.c.bf16 %v606, %v605
      %v629 = vpack.c.bf16 %v608, %v607
      %v630 = vpack.c.bf16 %v610, %v609
      %v631 = vpack.c.bf16 %v612, %v611
      %v632 = vpack.c.bf16 %v614, %v613
      %v633 = vpack.c.bf16 %v616, %v615
      %v634 = vpack.c.bf16 %v618, %v617
      %v651 = vunpack.c.l.b16 %v619
      %v652 = vunpack.c.h.b16 %v619
      %v653 = vunpack.c.l.b16 %v620
      %v654 = vunpack.c.h.b16 %v620
      %v655 = vunpack.c.l.b16 %v621
      %v656 = vunpack.c.h.b16 %v621
      %v657 = vunpack.c.l.b16 %v622
      %v658 = vunpack.c.h.b16 %v622
      %v659 = vunpack.c.l.b16 %v623
      %v660 = vunpack.c.h.b16 %v623
      %v661 = vunpack.c.l.b16 %v624
      %v662 = vunpack.c.h.b16 %v624
      %v663 = vunpack.c.l.b16 %v625
      %v664 = vunpack.c.h.b16 %v625
      %v665 = vunpack.c.l.b16 %v626
      %v666 = vunpack.c.h.b16 %v626
      %v667 = vunpack.c.l.b16 %v627
      %v668 = vunpack.c.h.b16 %v627
      %v669 = vunpack.c.l.b16 %v628
      %v670 = vunpack.c.h.b16 %v628
      %v671 = vunpack.c.l.b16 %v629
      %v672 = vunpack.c.h.b16 %v629
      %v673 = vunpack.c.l.b16 %v630
      %v674 = vunpack.c.h.b16 %v630
      %v675 = vunpack.c.l.b16 %v631
      %v676 = vunpack.c.h.b16 %v631
      %v677 = vunpack.c.l.b16 %v632
      %v678 = vunpack.c.h.b16 %v632
      %v679 = vunpack.c.l.b16 %v633
      %v680 = vunpack.c.h.b16 %v633
      %v681 = vunpack.c.l.b16 %v634
      %v682 = vunpack.c.h.b16 %v634
      %v683 = vpack.c.b16 %v651, %v651
      %v684 = vpack.c.b16 %v652, %v652
      %v685 = vpack.c.b16 %v653, %v653
      %v686 = vpack.c.b16 %v654, %v654
      %v687 = vpack.c.b16 %v655, %v655
      %v688 = vpack.c.b16 %v656, %v656
      %v689 = vpack.c.b16 %v657, %v657
      %v690 = vpack.c.b16 %v658, %v658
      %v691 = vpack.c.b16 %v659, %v659
      %v692 = vpack.c.b16 %v660, %v660
      %v693 = vpack.c.b16 %v661, %v661
      %v694 = vpack.c.b16 %v662, %v662
      %v695 = vpack.c.b16 %v663, %v663
      %v696 = vpack.c.b16 %v664, %v664
      %v697 = vpack.c.b16 %v665, %v665
      %v698 = vpack.c.b16 %v666, %v666
      %v699 = vpack.c.b16 %v667, %v667
      %v700 = vpack.c.b16 %v668, %v668
      %v701 = vpack.c.b16 %v669, %v669
      %v702 = vpack.c.b16 %v670, %v670
      %v703 = vpack.c.b16 %v671, %v671
      %v704 = vpack.c.b16 %v672, %v672
      %v705 = vpack.c.b16 %v673, %v673
      %v706 = vpack.c.b16 %v674, %v674
      %v707 = vpack.c.b16 %v675, %v675
      %v708 = vpack.c.b16 %v676, %v676
      %v709 = vpack.c.b16 %v677, %v677
      %v710 = vpack.c.b16 %v678, %v678
      %v711 = vpack.c.b16 %v679, %v679
      %v712 = vpack.c.b16 %v680, %v680
      %v713 = vpack.c.b16 %v681, %v681
      %v714 = vpack.c.b16 %v682, %v682
      %vm747 = vcmask 257024
      %748 = vst.msk [vmem:[%s223] sm:$0xf] %vm747, %v683
      %749 = vst.msk [vmem:[%s223 + $0x4] sm:$0xf] %vm747, %v684
      %750 = vst.msk [vmem:[%s223 + $0x8] sm:$0xf] %vm747, %v685
      %751 = vst.msk [vmem:[%s223 + $0xc] sm:$0xf] %vm747, %v686
      %752 = vst.msk [vmem:[%s223 + $0x10] sm:$0xf] %vm747, %v687
      %753 = vst.msk [vmem:[%s223 + $0x14] sm:$0xf] %vm747, %v688
      %754 = vst.msk [vmem:[%s223 + $0x18] sm:$0xf] %vm747, %v689
      %755 = vst.msk [vmem:[%s223 + $0x1c] sm:$0xf] %vm747, %v690
      %756 = vst.msk [vmem:[%s223 + $0x20] sm:$0xf] %vm747, %v691
      %757 = vst.msk [vmem:[%s223 + $0x24] sm:$0xf] %vm747, %v692
      %758 = vst.msk [vmem:[%s223 + $0x28] sm:$0xf] %vm747, %v693
      %759 = vst.msk [vmem:[%s223 + $0x2c] sm:$0xf] %vm747, %v694
      %760 = vst.msk [vmem:[%s223 + $0x30] sm:$0xf] %vm747, %v695
      %761 = vst.msk [vmem:[%s223 + $0x34] sm:$0xf] %vm747, %v696
      %762 = vst.msk [vmem:[%s223 + $0x38] sm:$0xf] %vm747, %v697
      %763 = vst.msk [vmem:[%s223 + $0x3c] sm:$0xf] %vm747, %v698
      %764 = vst.msk [vmem:[%s223 + $0x40] sm:$0xf] %vm747, %v699
      %765 = vst.msk [vmem:[%s223 + $0x44] sm:$0xf] %vm747, %v700
      %766 = vst.msk [vmem:[%s223 + $0x48] sm:$0xf] %vm747, %v701
      %767 = vst.msk [vmem:[%s223 + $0x4c] sm:$0xf] %vm747, %v702
      %768 = vst.msk [vmem:[%s223 + $0x50] sm:$0xf] %vm747, %v703
      %769 = vst.msk [vmem:[%s223 + $0x54] sm:$0xf] %vm747, %v704
      %770 = vst.msk [vmem:[%s223 + $0x58] sm:$0xf] %vm747, %v705
      %771 = vst.msk [vmem:[%s223 + $0x5c] sm:$0xf] %vm747, %v706
      %772 = vst.msk [vmem:[%s223 + $0x60] sm:$0xf] %vm747, %v707
      %773 = vst.msk [vmem:[%s223 + $0x64] sm:$0xf] %vm747, %v708
      %774 = vst.msk [vmem:[%s223 + $0x68] sm:$0xf] %vm747, %v709
      %775 = vst.msk [vmem:[%s223 + $0x6c] sm:$0xf] %vm747, %v710
      %776 = vst.msk [vmem:[%s223 + $0x70] sm:$0xf] %vm747, %v711
      %777 = vst.msk [vmem:[%s223 + $0x74] sm:$0xf] %vm747, %v712
      %778 = vst.msk [vmem:[%s223 + $0x78] sm:$0xf] %vm747, %v713
      %779 = vst.msk [vmem:[%s223 + $0x7c] sm:$0xf] %vm747, %v714
      %s780 = smul.u32 32, %s18
      %p781 = scmp.lt.s32.totalorder %s780, 63
      %s782 = scalar_select %p781, %s780, 63
      %p783 = scmp.lt.s32.totalorder %s19, 0
      %s784 = scalar_select %p783, %s19, 0
      %s785 = sadd.s32 %s784, %s782
      %s786 = smul.addr %s785, 4
      %s787 = scalar_lea.vmem %s3, %s786
      // Predicated region
      $region33: #{tpu_custom_call.1} parent=31 // pred_check
        %p788 = pneg %p124
      $region34: #{tpu_custom_call.1} parent=31 // pred_check_branch
        %790 = sbr.rel (%p788) target = $region36
      $region35: #{tpu_custom_call.1} parent=31 // pred_region
        %s791 = smul.u32 32, %s18
      $region36: #{tpu_custom_call.1} parent=31 // pred_fallthru
        _
    $region32: #{tpu_custom_call.1} parent=5 // pred_fallthru
      _
    %p792 = scmp.le.s32.totalorder 2, %s9
    // Predicated region
    $region37: #{tpu_custom_call.1} parent=5 // pred_check
      %p793 = pneg %p792
    $region38: #{tpu_custom_call.1} parent=5 // pred_check_branch
      %795 = sbr.rel (%p793) target = $region40
    $region39: #{tpu_custom_call.1} parent=5 // pred_region
      %s796 = ssub.s32 %s9, 2
      // Predicated region
      $region41: #{tpu_custom_call.1} parent=39 // pred_check
        %p797 = pneg %p130
      $region42: #{tpu_custom_call.1} parent=39 // pred_check_branch
        %799 = sbr.rel (%p797) target = $region44
      $region43: #{tpu_custom_call.1} parent=39 // pred_region
        %s800 = smul.u32 32, %s20
        %p801 = scmp.lt.s32.totalorder %s800, 63
        %s802 = scalar_select %p801, %s800, 63
        %p803 = scmp.lt.s32.totalorder %s21, 0
        %s804 = scalar_select %p803, %s21, 0
        %s805 = sadd.s32 %s804, %s802
        %s806 = smul.addr %s805, 4
        %s807 = scalar_lea.vmem %s3, %s806
      $region44: #{tpu_custom_call.1} parent=39 // pred_fallthru
        _
    $region40: #{tpu_custom_call.1} parent=5 // pred_fallthru
      _
  $region6: #{tpu_custom_call.1} parent=0 // loop_footer
    %s13 = sadd.s32 1, %s9
  $region7: #{tpu_custom_call.1} parent=0 // loop_footer_branch
    %8 = sbr.rel target = $region3
  $region8: #{tpu_custom_call.1} parent=0 // loop_exit
    _

</llo_original>
